<compile_context>
chip_gen: v6e
topology: v6e:2x2x1
jax: 0.10.0
libtpu: 0.0.40
codegen_flags: <defaults>
</compile_context>

<pallas_src>
import jax
import jax.numpy as jnp
from jax.experimental import pallas as pl
from jax.experimental.pallas import tpu as pltpu

_LANES = 128                      # vreg lane width
_SUBLANES = 8                     # vreg sublane count
_TARGET_BLOCK_BYTES = 2 << 20     # ~2 MiB/block -> <= 8 MiB resident
                                  # (2 inputs-bufs + 2 output-bufs double
                                  # buffered), safe under v5e's 16 MiB default.


def _identity_kernel(x_ref, o_ref):
    # Pure pass-through: forward() for 'OnGrid' performs no computation.
    o_ref[...] = x_ref[...]


def _flatten_lane_dense(x):
    """Reshape any tensor to a 2-D slab whose last dim is lane-dense (128)."""
    total = 1
    for d in x.shape:
        total *= int(d)
    if total >= _LANES and total % _LANES == 0:
        return x.reshape(total // _LANES, _LANES)
    # Fallback: single row, full-extent last dim (legal: block == full dims).
    return x.reshape(1, total)


def pallas_identity(x):
    """Bit-exact identity copy through a single lane-dense Pallas TPU kernel."""
    flat = _flatten_lane_dense(x)
    rows, cols = flat.shape
    itemsize = jnp.dtype(flat.dtype).itemsize

    # Pick a multi-MiB row tile (multiple of 8 sublanes) or the whole array.
    block_rows = max(1, _TARGET_BLOCK_BYTES // max(1, cols * itemsize))
    if block_rows >= rows:
        block_rows = rows                       # full extent -> always legal
    else:
        block_rows = max(_SUBLANES, (block_rows // _SUBLANES) * _SUBLANES)

    grid = (pl.cdiv(rows, block_rows),)
    spec = pl.BlockSpec((block_rows, cols), lambda i: (i, 0))

    out = pl.pallas_call(
        _identity_kernel,
        out_shape=jax.ShapeDtypeStruct(flat.shape, flat.dtype),
        grid=grid,
        in_specs=[spec],
        out_specs=spec,
        compiler_params=pltpu.CompilerParams(
            dimension_semantics=("parallel",),
        ),
    )(flat)
    return out.reshape(x.shape)


class DetectorWrapper:
    """JAX/Pallas port of src/coarse_match/utils/detector_wrapper.py."""

    def __init__(self, detector=None, detector_type="OnGrid", fullcfg=None,
                 debug_exercise_kernel=False):
        assert (
            detector_type in ["OnGrid", "SuperPoint", "SuperPointEC", "SIFT"]
            or "and grid" in detector_type
        )
        self.detector_type = detector_type
        self.debug_exercise_kernel = debug_exercise_kernel
        if detector_type == "OnGrid":
            assert detector is None
            self.detector = None  # stateless — no parameters

    def __call__(self, batch):
        return self.forward(batch)

    def forward(self, batch):
        if self.detector_type == "OnGrid":
            # Reference implementation is `pass`: no batch mutation, returns None.
            # The Pallas identity path is only taken when explicitly requested
            # for debugging; both images are fused into ONE kernel launch.
            if self.debug_exercise_kernel:
                imgs = [batch[k] for k in ("image0", "image1") if k in batch]
                if imgs:
                    fused = jnp.stack(imgs, axis=0)
                    _ = pallas_identity(fused)  # discarded — semantics unchanged
            return None
        else:
            raise NotImplementedError


if __name__ == "__main__":
    key = jax.random.PRNGKey(0)
    k0, k1 = jax.random.split(key)
    # Small LoFTR-style batch: image pairs, NCHW.
    batch = {
        "image0": jax.random.normal(k0, (2, 4, 16, 16), dtype=jnp.float32),
        "image1": jax.random.normal(k1, (2, 4, 16, 16), dtype=jnp.float32),
    }

    wrapper = DetectorWrapper(detector=None, detector_type="OnGrid")

    # Exercise the fused, lane-dense Pallas identity kernel once (single launch
    # for both images) and check bit-exact fidelity.
    fused_in = jnp.stack([batch["image0"], batch["image1"]], axis=0)
    fused_out = pallas_identity(fused_in)
    jax.block_until_ready(fused_out)
    assert fused_out.shape == fused_in.shape
    assert fused_out.dtype == fused_in.dtype
    assert bool(jnp.array_equal(fused_out, fused_in))
    assert bool(jnp.array_equal(fused_out[0], batch["image0"]))
    assert bool(jnp.array_equal(fused_out[1], batch["image1"]))

    # Wrapper forward: faithful no-op (no kernel launches, returns None,
    # batch untouched).
    before0, before1 = batch["image0"], batch["image1"]
    result = wrapper(batch)
    assert result is None
    assert batch["image0"] is before0 and batch["image1"] is before1

    print("KERNEL_OK")
</pallas_src>

<mosaic_0001>
module attributes {stable_mosaic.version = 11 : i64} {
  func.func @_identity_kernel(%arg0: i32, %arg1: memref<32x128xf32, #tpu.memory_space<vmem>>, %arg2: memref<32x128xf32, #tpu.memory_space<vmem>>) attributes {dimension_semantics = [#tpu.dimension_semantics<parallel>], iteration_bounds = array<i64: 1>, scalar_prefetch = 0 : i64, scratch_operands = 0 : i64, tpu.core_type = #tpu.core_type<tc>, window_params = [{transform_indices = @transform_0, window_bounds = array<i64: 32, 128>}, {transform_indices = @transform_1, window_bounds = array<i64: 32, 128>}]} {
    %c0 = arith.constant 0 : index
    %c0_0 = arith.constant 0 : index
    %0 = vector.load %arg1[%c0, %c0_0] : memref<32x128xf32, #tpu.memory_space<vmem>>, vector<32x128xf32>
    %c0_1 = arith.constant 0 : index
    %c0_2 = arith.constant 0 : index
    %1 = vector.load %arg2[%c0_1, %c0_2] : memref<32x128xf32, #tpu.memory_space<vmem>>, vector<32x128xf32>
    tpu.vector_store %arg2[%c0_1, %c0_2], %0 {strides = array<i32>} : memref<32x128xf32, #tpu.memory_space<vmem>>, vector<32x128xf32>,
    return
  }
  func.func @transform_0(%arg0: i32) -> (i32, i32) {
    %c0_i32 = arith.constant 0 : i32
    %c0_i32_0 = arith.constant 0 : i32
    return %arg0, %c0_i32 : i32, i32
  }
  func.func @transform_1(%arg0: i32) -> (i32, i32) {
    %c0_i32 = arith.constant 0 : i32
    %c0_i32_0 = arith.constant 0 : i32
    return %arg0, %c0_i32 : i32, i32
  }
}

</mosaic_0001>

<llo_original>
// kernel: tpu_custom_call.1
$region0: #{tpu_custom_call.1}
  #allocation0 [shape = 'u32[]', space=smem, size = 0x4, offset = 0x4, fixed_abs, tag = 'smem constant byte address 0x4 - core index']
  #allocation1 [shape = 'u32[144,128]{1,0:T(1,128)}', space=vmem, size = 0x12000, scoped, tag = 'internal scratch']
  %s0 = inlined_call_operand.hbm [shape: f32[32,128], index: 0, kind: input, shape index: {}]
  %s1 = inlined_call_operand.hbm [shape: f32[32,128], index: 1, kind: output, shape index: {}]
  %s2 = sld [smem:[#allocation0]]
  $region18: #{tpu_custom_call.1} parent=0
    _
  %s4 = ssub.s32 1, %s2
  %s5 = scalar_select 0, %s4, %s2
  $region1: #{tpu_custom_call.1} parent=0
    #allocation2 [shape = 'u8[16384]{0}', space=vmem, size = 0x4000, scoped, tag = 'input window, operand 0, single buffered']
    #allocation3 [shape = 's32[1]{0}', space=sflag, size = 0x4, scoped, tag = 'scoped memory for tpu_custom_call.1']
    #allocation4 [shape = 's32[1]{0}', space=sflag, size = 0x4, scoped, tag = 'scoped memory for tpu_custom_call.1']
    #allocation5 [shape = 'u8[16384]{0}', space=vmem, size = 0x4000, scoped, tag = 'output window, operand 0, single buffered']
    %6 = vsyncpa [#allocation3], 0
    %7 = vsyncpa [#allocation4], 0
    // Predicated region
    $region2: #{tpu_custom_call.1} parent=1 // pred_check
      _
    $region3: #{tpu_custom_call.1} parent=1 // pred_check_branch
      %9 = sbr.rel (0) target = $region5
    $region4: #{tpu_custom_call.1} parent=1 // pred_region
      %s11 = ssub.s32 512, 512
      %12 = vsyncadd [#allocation3], %s11
      %s13 = sshll.u32 [#allocation2], 4
      %s14 = int_to_ptr.vmem [resolvable:$true] %s13
      %19 = dma.hbm_to_vmem [thread:$0]  %s0, 512, %s14, [#allocation3], 128, 128, 8
    $region5: #{tpu_custom_call.1} parent=1 // pred_fallthru
      _
    // Predicated region
    $region6: #{tpu_custom_call.1} parent=1 // pred_check
      _
    $region7: #{tpu_custom_call.1} parent=1 // pred_check_branch
      %21 = sbr.rel (0) target = $region9
    $region8: #{tpu_custom_call.1} parent=1 // pred_region
      %22 = dma.done [#allocation3], 512
    $region9: #{tpu_custom_call.1} parent=1 // pred_fallthru
      _
    %v23 = vld [vmem:[#allocation2] sm:$0xff]
    %v24 = vld [vmem:[#allocation2 + $0x8] sm:$0xff]
    %v25 = vld [vmem:[#allocation2 + $0x10] sm:$0xff]
    %v26 = vld [vmem:[#allocation2 + $0x18] sm:$0xff]
    %27 = vst [vmem:[#allocation5] sm:$0xff] %v23
    %28 = vst [vmem:[#allocation5 + $0x8] sm:$0xff] %v24
    %29 = vst [vmem:[#allocation5 + $0x10] sm:$0xff] %v25
    %30 = vst [vmem:[#allocation5 + $0x18] sm:$0xff] %v26
    // Predicated region
    $region10: #{tpu_custom_call.1} parent=1 // pred_check
      _
    $region11: #{tpu_custom_call.1} parent=1 // pred_check_branch
      %32 = sbr.rel (0) target = $region13
    $region12: #{tpu_custom_call.1} parent=1 // pred_region
      %s34 = ssub.s32 512, 512
      %35 = vsyncadd [#allocation4], %s34
      %s36 = sshll.u32 [#allocation5], 4
      %s37 = int_to_ptr.vmem [resolvable:$true] %s36
      %42 = dma.vmem_to_hbm [thread:$0]  %s37, 512, %s1, [#allocation4], 128, 128, 8
    $region13: #{tpu_custom_call.1} parent=1 // pred_fallthru
      _
    // Predicated region
    $region14: #{tpu_custom_call.1} parent=1 // pred_check
      _
    $region15: #{tpu_custom_call.1} parent=1 // pred_check_branch
      %44 = sbr.rel (0) target = $region17
    $region16: #{tpu_custom_call.1} parent=1 // pred_region
      %45 = dma.done [#allocation4], 512
    $region17: #{tpu_custom_call.1} parent=1 // pred_fallthru
      _
    %46 = vsyncpa [#allocation3], 1
    %47 = vsyncpa [#allocation4], 1

</llo_original>
